<compile_context>
chip_gen: v5e
topology: v5e:2x2
jax: 0.10.0
libtpu: 0.0.40
codegen_flags: <defaults>
</compile_context>

<pallas_src>
import functools

import numpy as np

import jax
import jax.numpy as jnp
from jax.experimental import pallas as pl
from jax.experimental.pallas import tpu as pltpu

_LANE = 128


def _round_up(x, m):
    return ((x + m - 1) // m) * m


def _pow2_tile_le(x):
    """Largest power-of-two multiple of 128 that is <= max(x, 128)."""
    t = _LANE
    while t * 2 <= x:
        t *= 2
    return t


def _mosaic_params(dim_sem, vmem_need_bytes):
    # Raise the scoped-VMEM limit only when the (conservative, double/triple
    # buffered) working set exceeds the smallest default (v5e: 16 MiB).  Cap per
    # generation when the hardware info is queryable (v7x has only 64 MiB physical).
    limit = None
    if vmem_need_bytes > (12 << 20):
        cap = 32 << 20
        try:
            cap = max(cap, int(pltpu.get_tpu_info().vmem_capacity_bytes * 3 // 4))
        except Exception:
            pass
        limit = int(min(vmem_need_bytes + (4 << 20), cap))
    return pltpu.CompilerParams(dimension_semantics=dim_sem,
                                vmem_limit_bytes=limit)


def _maybe_buffered_spec(block_shape, index_map, depth=3):
    """A_hat is the dominant stream; ask for a 3-deep pipeline when supported."""
    buffered = getattr(pl, "Buffered", None)
    if buffered is not None:
        try:
            return pl.BlockSpec(block_shape, index_map, pipeline_mode=buffered(depth))
        except TypeError:
            pass
    return pl.BlockSpec(block_shape, index_map)


# ----------------------------------------------------------------------------
# Phase 1 (layer 0 only): H_cat = X @ [W_out | W_root]  (+ bias on root half)
# ----------------------------------------------------------------------------
def _proj_kernel(x_ref, w_ref, b_ref, hout_ref, hroot_ref):
    # x_ref: (tile_n, F_in) bf16, w_ref: (F_in, 2*F_out) bf16, b_ref: (1, F_out) f32
    h = jnp.dot(x_ref[...], w_ref[...], preferred_element_type=jnp.float32)
    f_out = hout_ref.shape[1]
    hout_ref[...] = h[:, :f_out].astype(hout_ref.dtype)                  # bf16, feeds MXU
    hroot_ref[...] = (h[:, f_out:] + b_ref[...]).astype(hroot_ref.dtype)  # f32


def project_features(x, w_cat, bias, *, f_out, tile_n):
    n, f_in = x.shape
    buf = (tile_n * f_in * 2 + f_in * 2 * f_out * 2 + f_out * 4
           + tile_n * f_out * 2 + tile_n * f_out * 4)
    return pl.pallas_call(
        _proj_kernel,
        out_shape=(jax.ShapeDtypeStruct((n, f_out), jnp.bfloat16),
                   jax.ShapeDtypeStruct((n, f_out), jnp.float32)),
        grid_spec=pltpu.PrefetchScalarGridSpec(
            num_scalar_prefetch=0,
            grid=(n // tile_n,),
            in_specs=[
                pl.BlockSpec((tile_n, f_in), lambda i: (i, 0)),        # X row tile (bf16)
                pl.BlockSpec((f_in, 2 * f_out), lambda i: (0, 0)),     # [W_out|W_root] (bf16)
                pl.BlockSpec((1, f_out), lambda i: (0, 0)),            # bias (f32)
            ],
            out_specs=(pl.BlockSpec((tile_n, f_out), lambda i: (i, 0)),
                       pl.BlockSpec((tile_n, f_out), lambda i: (i, 0))),
        ),
        compiler_params=_mosaic_params(("parallel",), 2 * buf),
    )(x, w_cat, bias)


# ----------------------------------------------------------------------------
# Phase 2: aggregation  y = relu( (A_hat @ H_out) * deg_inv + H_root )
#          (+ fused next-layer projection  y_bf16 @ [W_out|W_root] + b)
# Grid: (dst row tiles [parallel], nonzero src-block slots [arbitrary, last])
# ----------------------------------------------------------------------------
def _agg_fused_kernel(kblk_ref, nnz_ref, a_ref, hout_ref, hroot_ref, dinv_ref,
                      wnext_ref, bnext_ref, hout_next_ref, hroot_next_ref, acc_ref):
    i = pl.program_id(0)
    s = pl.program_id(1)

    @pl.when(s == 0)
    def _():
        acc_ref[...] = jnp.zeros_like(acc_ref)

    # Skip padded (repeated) block slots; bf16 x bf16 -> f32 accumulate on the MXU.
    @pl.when(s < nnz_ref[i])
    def _():
        acc_ref[...] += jnp.dot(a_ref[...], hout_ref[...],
                                preferred_element_type=jnp.float32)

    @pl.when(s == pl.num_programs(1) - 1)
    def _():
        y = acc_ref[...] * dinv_ref[...] + hroot_ref[...]
        y = jnp.maximum(y, 0.0)     # ReLU between layers; dropout is identity (eval)
        h = jnp.dot(y.astype(wnext_ref.dtype), wnext_ref[...],
                    preferred_element_type=jnp.float32)
        f_next = hout_next_ref.shape[1]
        hout_next_ref[...] = h[:, :f_next].astype(hout_next_ref.dtype)
        hroot_next_ref[...] = (h[:, f_next:] + bnext_ref[...]).astype(hroot_next_ref.dtype)


def _agg_final_kernel(kblk_ref, nnz_ref, a_ref, hout_ref, hroot_ref, dinv_ref,
                      out_ref, acc_ref):
    i = pl.program_id(0)
    s = pl.program_id(1)

    @pl.when(s == 0)
    def _():
        acc_ref[...] = jnp.zeros_like(acc_ref)

    @pl.when(s < nnz_ref[i])
    def _():
        acc_ref[...] += jnp.dot(a_ref[...], hout_ref[...],
                                preferred_element_type=jnp.float32)

    @pl.when(s == pl.num_programs(1) - 1)
    def _():
        out_ref[...] = (acc_ref[...] * dinv_ref[...] + hroot_ref[...]).astype(out_ref.dtype)


def aggregate(a_hat, hout, hroot, dinv, kblk, nnz, max_nnz, *,
              tile_n, tile_k, w_next=None, b_next=None):
    n = a_hat.shape[0]
    f_out = hout.shape[1]
    nr = n // tile_n
    fuse_next = w_next is not None

    # Data-dependent block index_maps driven by the scalar-prefetched schedule.
    def a_map(i, s, kb, nz):
        return (i, kb[i * max_nnz + s])

    def h_map(i, s, kb, nz):
        return (kb[i * max_nnz + s], 0)

    def row_map(i, s, kb, nz):
        return (i, 0)

    def const_map(i, s, kb, nz):
        return (0, 0)

    in_specs = [
        _maybe_buffered_spec((tile_n, tile_k), a_map, depth=3),   # A_hat tile (bf16)
        pl.BlockSpec((tile_k, f_out), h_map),                     # H_out src tile (bf16)
        pl.BlockSpec((tile_n, f_out), row_map),                   # H_root (+bias, f32)
        pl.BlockSpec((tile_n, 1), row_map),                       # deg_inv (f32)
    ]
    inputs = [a_hat, hout, hroot, dinv]

    # Conservative VMEM accounting (A triple-buffered, everything else double).
    need = (3 * tile_n * tile_k * 2
            + 2 * (tile_k * f_out * 2 + tile_n * f_out * 4 + tile_n * 4)
            + tile_n * f_out * 4)

    if fuse_next:
        f_next = w_next.shape[1] // 2
        in_specs += [pl.BlockSpec(w_next.shape, const_map),       # next [W_out|W_root] (bf16)
                     pl.BlockSpec((1, f_next), const_map)]        # next bias (f32)
        inputs += [w_next, b_next]
        out_shape = (jax.ShapeDtypeStruct((n, f_next), jnp.bfloat16),
                     jax.ShapeDtypeStruct((n, f_next), jnp.float32))
        out_specs = (pl.BlockSpec((tile_n, f_next), row_map),
                     pl.BlockSpec((tile_n, f_next), row_map))
        kernel = _agg_fused_kernel
        need += 2 * (w_next.size * 2 + f_next * 4
                     + tile_n * f_next * 2 + tile_n * f_next * 4)
    else:
        out_shape = jax.ShapeDtypeStruct((n, f_out), jnp.float32)
        out_specs = pl.BlockSpec((tile_n, f_out), row_map)
        kernel = _agg_final_kernel
        need += 2 * tile_n * f_out * 4

    return pl.pallas_call(
        kernel,
        out_shape=out_shape,
        grid_spec=pltpu.PrefetchScalarGridSpec(
            num_scalar_prefetch=2,
            grid=(nr, max_nnz),
            in_specs=in_specs,
            out_specs=out_specs,
            scratch_shapes=[pltpu.VMEM((tile_n, f_out), jnp.float32)],
        ),
        compiler_params=_mosaic_params(("parallel", "arbitrary"), need),
    )(kblk, nnz, *inputs)


# ----------------------------------------------------------------------------
# Parameter / graph preparation
# ----------------------------------------------------------------------------
def prepare_params(raw_params, in_channels):
    """Pad F_in/F_out to lane multiples, fuse [W_out|W_root] as bf16, keep bias f32."""
    prepared = []
    f_in_cur = _round_up(in_channels, _LANE)
    for (w_out, w_root, b) in raw_params:
        f_in, f_out = w_out.shape
        f_out_pad = _round_up(f_out, _LANE)
        w_cat = jnp.zeros((f_in_cur, 2 * f_out_pad), jnp.float32)
        w_cat = w_cat.at[:f_in, :f_out].set(w_out)
        w_cat = w_cat.at[:f_in, f_out_pad:f_out_pad + f_out].set(w_root)
        b_p = jnp.zeros((1, f_out_pad), jnp.float32).at[:, :f_out].set(b)
        prepared.append((w_cat.astype(jnp.bfloat16), b_p, f_out_pad))
        f_in_cur = f_out_pad
    return prepared


def plan_tiles(num_nodes, *, tile_n=512, tile_k=2048, tile_proj=1024):
    """Clamp requested tiles (powers of two x 128) to the graph size; keep >=2 row tiles."""
    cap = _pow2_tile_le(_round_up(num_nodes, _LANE))
    tile_n = min(tile_n, cap)
    tile_k = min(tile_k, cap)
    tile_proj = min(tile_proj, cap)
    n_pad = _round_up(num_nodes, max(tile_n, tile_k, tile_proj))
    # v7x has 2 TensorCores sharded over the "parallel" row axis: keep >= 2 row tiles.
    while tile_n > _LANE and n_pad // tile_n < 2:
        tile_n //= 2
    while tile_proj > _LANE and n_pad // tile_proj < 2:
        tile_proj //= 2
    return tile_n, tile_k, tile_proj, n_pad


def build_graph(edge_index, num_nodes, n_pad):
    """0/1 bf16 A_hat (self loops on real nodes only) + f32 deg_inv, padded to n_pad."""
    src, dst = edge_index[0], edge_index[1]
    a = jnp.zeros((n_pad, n_pad), jnp.float32)
    a = a.at[dst, src].set(1.0)                 # A[i, j] = 1 for edge j -> i
    diag = jnp.arange(n_pad)
    real = (diag < num_nodes).astype(jnp.float32)
    a = a.at[diag, diag].set(real)              # remove + add self loops (real rows)
    deg = jnp.maximum(a.sum(axis=1, keepdims=True), 1.0)
    dinv = 1.0 / deg
    return a.astype(jnp.bfloat16), dinv         # 0/1 exact in bf16


def build_block_schedule(a_hat, tile_n, tile_k):
    """Per dst-row-tile compressed list of nonzero (tile_n, tile_k) A blocks."""
    n_pad = a_hat.shape[0]
    nr, nk = n_pad // tile_n, n_pad // tile_k
    blk = np.asarray(a_hat.astype(jnp.float32)).reshape(nr, tile_n, nk, tile_k)
    blk = blk.sum(axis=(1, 3)) > 0.0
    nnz = blk.sum(axis=1).astype(np.int32)
    max_nnz = max(int(nnz.max()), 1)
    kblk = np.zeros((nr, max_nnz), np.int32)
    for i in range(nr):
        idx = np.nonzero(blk[i])[0].astype(np.int32)
        if idx.size:
            kblk[i, :idx.size] = idx
            kblk[i, idx.size:] = idx[-1]        # repeat last -> pipeline skips re-DMA
    return jnp.asarray(kblk.reshape(-1)), jnp.asarray(nnz), max_nnz


# ----------------------------------------------------------------------------
# Model: ClusterGCN forward (inference mode: dropout is identity)
# ----------------------------------------------------------------------------
def cluster_gcn_forward(x, a_hat, dinv, kblk, nnz, max_nnz, prepared_params,
                        out_channels, *, tile_n, tile_k, tile_proj):
    n = x.shape[0]
    n_pad = a_hat.shape[0]
    f_in_pad = prepared_params[0][0].shape[0]
    x = jnp.pad(x, ((0, n_pad - n), (0, f_in_pad - x.shape[1]))).astype(jnp.bfloat16)

    w0, b0, f0 = prepared_params[0]
    hout, hroot = project_features(x, w0, b0, f_out=f0, tile_n=tile_proj)

    num_layers = len(prepared_params)
    out = None
    for li in range(num_layers):
        if li < num_layers - 1:
            # ReLU + next-layer projection are fused into the aggregate epilogue.
            w_next, b_next, _ = prepared_params[li + 1]
            hout, hroot = aggregate(a_hat, hout, hroot, dinv, kblk, nnz, max_nnz,
                                    tile_n=tile_n, tile_k=tile_k,
                                    w_next=w_next, b_next=b_next)
        else:
            out = aggregate(a_hat, hout, hroot, dinv, kblk, nnz, max_nnz,
                            tile_n=tile_n, tile_k=tile_k)
    # TODO(synk): F.dropout with training=True not modeled; eval-mode (identity) only.
    return out[:n, :out_channels]


def cluster_gcn_forward_ref(x, edge_index, raw_params):
    """Pure-JAX f32 reference for correctness checking."""
    n = x.shape[0]
    src, dst = edge_index[0], edge_index[1]
    a = jnp.zeros((n, n), jnp.float32).at[dst, src].set(1.0)
    diag = jnp.arange(n)
    a = a.at[diag, diag].set(1.0)               # remove then add self loops
    a_norm = a / jnp.maximum(a.sum(axis=1, keepdims=True), 1.0)
    num_layers = len(raw_params)
    for li, (w_out, w_root, b) in enumerate(raw_params):
        y = (a_norm @ x) @ w_out + b + x @ w_root
        if li < num_layers - 1:
            y = jnp.maximum(y, 0.0)
        x = y
    return x


def init_params(key, in_channels, hidden_channels, out_channels, num_layers):
    dims = [in_channels] + [hidden_channels] * (num_layers - 1) + [out_channels]
    params = []
    for li in range(num_layers):
        f_in, f_out = dims[li], dims[li + 1]
        key, k1, k2, k3 = jax.random.split(key, 4)
        scale = (6.0 / (f_in + f_out)) ** 0.5
        w_out = jax.random.uniform(k1, (f_in, f_out), jnp.float32, -scale, scale)
        w_root = jax.random.uniform(k2, (f_in, f_out), jnp.float32, -scale, scale)
        b = jax.random.uniform(k3, (1, f_out), jnp.float32, -scale, scale)
        params.append((w_out, w_root, b))
    return params


if __name__ == "__main__":
    # Small synthetic, cluster-structured graph consistent with the module's forward.
    num_nodes = 500                 # not a tile multiple -> exercises N padding
    in_channels, hidden_channels, out_channels = 64, 128, 32
    num_layers = 3

    key = jax.random.PRNGKey(0)
    k_x, k_e1, k_e2, k_params, k_cross = jax.random.split(key, 5)

    x = jax.random.normal(k_x, (num_nodes, in_channels), jnp.float32)

    # Cluster-local edges (ClusterGCN-style): two clusters [0,256) and [256,500),
    # plus a few cross edges into cluster 0 so per-row-tile nonzero-block counts
    # differ (exercises padded-slot skipping in the block-sparse schedule).
    e_per_cluster = 800
    s0 = jax.random.randint(k_e1, (e_per_cluster,), 0, 256)
    d0 = jax.random.randint(k_e2, (e_per_cluster,), 0, 256)
    k_e3, k_e4, k_e5 = jax.random.split(k_cross, 3)
    s1 = jax.random.randint(k_e3, (e_per_cluster,), 256, num_nodes)
    d1 = jax.random.randint(k_e4, (e_per_cluster,), 256, num_nodes)
    sx = jax.random.randint(k_e5, (16,), 256, num_nodes)
    dx = jax.random.randint(jax.random.fold_in(k_e5, 1), (16,), 0, 256)
    src = jnp.concatenate([s0, s1, sx])
    dst = jnp.concatenate([d0, d1, dx])
    edge_index = jnp.stack([src, dst], axis=0)

    raw_params = init_params(k_params, in_channels, hidden_channels,
                             out_channels, num_layers)
    prepared_params = prepare_params(raw_params, in_channels)

    ref = jax.block_until_ready(cluster_gcn_forward_ref(x, edge_index, raw_params))
    scale = float(jnp.max(jnp.abs(ref)))

    # Config 1: small tiles -> multi-step reduction, block skipping, padding slots.
    # Config 2: default (large, perf-tuned) tiles, clamped to this toy graph size.
    for (tn_req, tk_req, tp_req) in ((256, 256, 256), (512, 2048, 1024)):
        tile_n, tile_k, tile_proj, n_pad = plan_tiles(
            num_nodes, tile_n=tn_req, tile_k=tk_req, tile_proj=tp_req)
        a_hat, dinv = build_graph(edge_index, num_nodes, n_pad)     # built once, reused
        kblk, nnz, max_nnz = build_block_schedule(a_hat, tile_n, tile_k)
        out = cluster_gcn_forward(x, a_hat, dinv, kblk, nnz, max_nnz,
                                  prepared_params, out_channels,
                                  tile_n=tile_n, tile_k=tile_k, tile_proj=tile_proj)
        out = jax.block_until_ready(out)
        assert out.shape == (num_nodes, out_channels)
        # bf16 X / W / A_hat / H_out streams -> relaxed tolerance vs f32 reference.
        err = float(jnp.max(jnp.abs(out - ref)))
        assert err <= 4e-2 * scale + 1e-3, (
            f"mismatch vs reference: {err} (scale {scale}, tiles {tile_n},{tile_k})")

    print("KERNEL_OK")
</pallas_src>

<mosaic_0001>
module attributes {stable_mosaic.version = 11 : i64} {
  func.func @_proj_kernel(%arg0: i32, %arg1: memref<256x128xbf16, #tpu.memory_space<vmem>>, %arg2: memref<128x256xbf16, #tpu.memory_space<vmem>>, %arg3: memref<1x128xf32, #tpu.memory_space<vmem>>, %arg4: memref<256x128xbf16, #tpu.memory_space<vmem>>, %arg5: memref<256x128xf32, #tpu.memory_space<vmem>>) attributes {dimension_semantics = [#tpu.dimension_semantics<parallel>], iteration_bounds = array<i64: 2>, scalar_prefetch = 0 : i64, scratch_operands = 0 : i64, tpu.core_type = #tpu.core_type<tc>, window_params = [{transform_indices = @transform_0, window_bounds = array<i64: 256, 128>}, {pipeline_mode = #tpu.pipeline_mode<synchronous>, transform_indices = @transform_1, window_bounds = array<i64: 128, 256>}, {pipeline_mode = #tpu.pipeline_mode<synchronous>, transform_indices = @transform_2, window_bounds = array<i64: 1, 128>}, {transform_indices = @transform_3, window_bounds = array<i64: 256, 128>}, {transform_indices = @transform_4, window_bounds = array<i64: 256, 128>}]} {
    %c0 = arith.constant 0 : index
    %c0_0 = arith.constant 0 : index
    %0 = vector.load %arg1[%c0, %c0_0] : memref<256x128xbf16, #tpu.memory_space<vmem>>, vector<256x128xbf16>
    %c0_1 = arith.constant 0 : index
    %c0_2 = arith.constant 0 : index
    %1 = vector.load %arg2[%c0_1, %c0_2] : memref<128x256xbf16, #tpu.memory_space<vmem>>, vector<128x256xbf16>
    %cst = arith.constant dense<0.000000e+00> : vector<256x256xf32>
    %2 = tpu.matmul %0, %1, %cst {dimension_numbers = #tpu.dot_dimension_numbers<[1], [0], [0], [1], [0, 0, 1, 1], [], []>} : vector<256x128xbf16>, vector<128x256xbf16>, vector<256x256xf32> -> vector<256x256xf32>
    %3 = vector.extract_strided_slice %2 {offsets = [0, 0], sizes = [256, 128], strides = [1, 1]} : vector<256x256xf32> to vector<256x128xf32>
    %4 = arith.truncf %3 : vector<256x128xf32> to vector<256x128xbf16>
    %c0_3 = arith.constant 0 : index
    %c0_4 = arith.constant 0 : index
    %5 = vector.load %arg4[%c0_3, %c0_4] : memref<256x128xbf16, #tpu.memory_space<vmem>>, vector<256x128xbf16>
    tpu.vector_store %arg4[%c0_3, %c0_4], %4 {strides = array<i32>} : memref<256x128xbf16, #tpu.memory_space<vmem>>, vector<256x128xbf16>,
    %6 = vector.extract_strided_slice %2 {offsets = [0, 128], sizes = [256, 128], strides = [1, 1]} : vector<256x256xf32> to vector<256x128xf32>
    %c0_5 = arith.constant 0 : index
    %c0_6 = arith.constant 0 : index
    %7 = vector.load %arg3[%c0_5, %c0_6] : memref<1x128xf32, #tpu.memory_space<vmem>>, vector<1x128xf32>
    %8 = vector.broadcast %7 : vector<1x128xf32> to vector<256x128xf32>
    %9 = arith.addf %6, %8 : vector<256x128xf32>
    %c0_7 = arith.constant 0 : index
    %c0_8 = arith.constant 0 : index
    %10 = vector.load %arg5[%c0_7, %c0_8] : memref<256x128xf32, #tpu.memory_space<vmem>>, vector<256x128xf32>
    tpu.vector_store %arg5[%c0_7, %c0_8], %9 {strides = array<i32>} : memref<256x128xf32, #tpu.memory_space<vmem>>, vector<256x128xf32>,
    return
  }
  func.func @transform_0(%arg0: i32) -> (i32, i32) {
    %c0_i32 = arith.constant 0 : i32
    %c0_i32_0 = arith.constant 0 : i32
    return %arg0, %c0_i32 : i32, i32
  }
  func.func @transform_1(%arg0: i32) -> (i32, i32) {
    %c0_i32 = arith.constant 0 : i32
    %c0_i32_0 = arith.constant 0 : i32
    %c0_i32_1 = arith.constant 0 : i32
    return %c0_i32, %c0_i32_0 : i32, i32
  }
  func.func @transform_2(%arg0: i32) -> (i32, i32) {
    %c0_i32 = arith.constant 0 : i32
    %c0_i32_0 = arith.constant 0 : i32
    %c0_i32_1 = arith.constant 0 : i32
    return %c0_i32, %c0_i32_0 : i32, i32
  }
  func.func @transform_3(%arg0: i32) -> (i32, i32) {
    %c0_i32 = arith.constant 0 : i32
    %c0_i32_0 = arith.constant 0 : i32
    return %arg0, %c0_i32 : i32, i32
  }
  func.func @transform_4(%arg0: i32) -> (i32, i32) {
    %c0_i32 = arith.constant 0 : i32
    %c0_i32_0 = arith.constant 0 : i32
    return %arg0, %c0_i32 : i32, i32
  }
}

</mosaic_0001>

<llo_original>
// kernel: tpu_custom_call.1
$region0: #{tpu_custom_call.1}
  #allocation0 [shape = 'u32[]', space=smem, size = 0x4, offset = 0x4, fixed_abs, tag = 'smem constant byte address 0x4 - core index']
  #allocation1 [shape = 'u32[72,128]{1,0:T(1,128)}', space=vmem, size = 0x9000, scoped, tag = 'internal scratch']
  %s0 = inlined_call_operand.hbm [shape: bf16[512,128], index: 0, kind: input, shape index: {}]
  %s1 = inlined_call_operand.hbm [shape: bf16[128,256], index: 1, kind: input, shape index: {}]
  %s2 = inlined_call_operand.vmem [shape: f32[1,128], index: 2, kind: input, shape index: {}]
  %s3 = inlined_call_operand.hbm [shape: bf16[512,128], index: 3, kind: output, shape index: {0}]
  %s4 = inlined_call_operand.hbm [shape: f32[512,128], index: 4, kind: output, shape index: {1}]
  %5 = xla_tuple %s3, %s4
  %s6 = sld [smem:[#allocation0]]
  $region61: #{tpu_custom_call.1} parent=0
    _
  %s8 = ssub.s32 1, %s6
  %s9 = scalar_select 0, %s8, %s6
  $region1: #{tpu_custom_call.1} parent=0
    #allocation2 [shape = 'u8[131072]{0}', space=vmem, size = 0x20000, scoped, tag = 'input window, operand 0']
    #allocation3 [shape = 's32[2]{0}', space=sflag, size = 0x8, scoped, tag = 'scoped memory for tpu_custom_call.1']
    #allocation4 [shape = 's32[2]{0}', space=sflag, size = 0x8, scoped, tag = 'scoped memory for tpu_custom_call.1']
    #allocation5 [shape = 'u8[65536]{0}', space=vmem, size = 0x10000, scoped, tag = 'input window, operand 1, single buffered']
    #allocation6 [shape = 's32[1]{0}', space=sflag, size = 0x4, scoped, tag = 'scoped memory for tpu_custom_call.1']
    #allocation7 [shape = 'u8[131072]{0}', space=vmem, size = 0x20000, scoped, tag = 'output window, operand 0']
    #allocation8 [shape = 'u8[262144]{0}', space=vmem, size = 0x40000, scoped, tag = 'output window, operand 1']
    #allocation9 [shape = 's32[2]{0}', space=sflag, size = 0x8, scoped, tag = 'scoped memory for tpu_custom_call.1']
    %10 = vsyncpa [#allocation3], 0
    %s11 = scalar_lea.sflag [#allocation3], 1
    %12 = vsyncpa %s11, 0
    %13 = vsyncpa [#allocation6], 0
    %14 = vsyncpa [#allocation4], 0
    %s15 = scalar_lea.sflag [#allocation4], 1
    %16 = vsyncpa %s15, 0
    %17 = vsyncpa [#allocation9], 0
    %s18 = scalar_lea.sflag [#allocation9], 1
    %19 = vsyncpa %s18, 0
    loop: start=0, step=1, limit=4
    $region2: #{tpu_custom_call.1} parent=1 // loop_pre_header
      _
    $region3: #{tpu_custom_call.1} parent=1 // loop_header
      %s21 = sphi 0, %s25
      %p22 = scmp.ge.s32.totalorder %s21, 4
      %s31 = sphi 0, %s33
      %s34 = sphi 0, %s31
      %s35 = sphi 0, %s34
      %s51 = sphi 0, %s35
      %s55 = sphi 0, %s55
      %s57 = sphi 0, %s55
      %s58 = sphi 0, %s57
      %s72 = sphi 0, %s58
      %s76 = sphi 0, %s76
      %s78 = sphi 0, %s76
      %s79 = sphi 0, %s78
      %s93 = sphi 0, %s79
      %s99 = sphi 0, %s101
      %s102 = sphi 0, %s99
      %s103 = sphi 0, %s102
      %s119 = sphi 0, %s103
      %s125 = sphi 0, %s127
      %s128 = sphi 0, %s125
      %s129 = sphi 0, %s128
      %s145 = sphi 0, %s129
    $region4: #{tpu_custom_call.1} parent=1 // loop_header_branch
      %24 = sbr.rel (%p22) target = $region8
    $region5: #{tpu_custom_call.1} parent=1 // loop_body
      %s26 = ssub.s32 %s21, 1
      %s27 = ssub.s32 %s21, 2
      %s28 = sadd.s32 %s21, 1
      %s29 = ssub.s32 %s21, %s28
      %p30 = scmp.eq.s32.totalorder %s29, 0
      %s32 = sadd.s32 %s31, 1
      %s33 = scalar_select %p30, %s31, %s32
      %p36 = pneg %p30
      %p37 = scmp.eq.s32.totalorder %s21, 1
      %p38 = por %p36, %p37
      %p39 = scmp.ne.s32.totalorder %s31, %s34
      %p40 = scmp.eq.s32.totalorder %s21, 0
      %p41 = por %p39, %p40
      %p42 = scmp.ne.s32.totalorder %s31, %s34
      %p43 = scmp.eq.s32.totalorder %s26, 1
      %p44 = por %p42, %p43
      %p45 = scmp.ne.s32.totalorder %s34, %s35
      %p46 = scmp.eq.s32.totalorder %s26, 0
      %p47 = por %p45, %p46
      %p48 = scmp.ne.s32.totalorder %s34, %s35
      %p49 = scmp.eq.s32.totalorder %s27, 1
      %p50 = por %p48, %p49
      %p52 = scmp.ne.s32.totalorder %s35, %s51
      %p53 = scmp.eq.s32.totalorder %s27, 0
      %p54 = por %p52, %p53
      %s56 = sadd.s32 %s55, 1
      %p59 = scmp.eq.s32.totalorder %s21, 1
      %p60 = scmp.ne.s32.totalorder %s55, %s57
      %p61 = scmp.eq.s32.totalorder %s21, 0
      %p62 = por %p60, %p61
      %p63 = scmp.ne.s32.totalorder %s55, %s57
      %p64 = scmp.eq.s32.totalorder %s26, 1
      %p65 = por %p63, %p64
      %p66 = scmp.ne.s32.totalorder %s57, %s58
      %p67 = scmp.eq.s32.totalorder %s26, 0
      %p68 = por %p66, %p67
      %p69 = scmp.ne.s32.totalorder %s57, %s58
      %p70 = scmp.eq.s32.totalorder %s27, 1
      %p71 = por %p69, %p70
      %p73 = scmp.ne.s32.totalorder %s58, %s72
      %p74 = scmp.eq.s32.totalorder %s27, 0
      %p75 = por %p73, %p74
      %s77 = sadd.s32 %s76, 1
      %p80 = scmp.eq.s32.totalorder %s21, 1
      %p81 = scmp.ne.s32.totalorder %s76, %s78
      %p82 = scmp.eq.s32.totalorder %s21, 0
      %p83 = por %p81, %p82
      %p84 = scmp.ne.s32.totalorder %s76, %s78
      %p85 = scmp.eq.s32.totalorder %s26, 1
      %p86 = por %p84, %p85
      %p87 = scmp.ne.s32.totalorder %s78, %s79
      %p88 = scmp.eq.s32.totalorder %s26, 0
      %p89 = por %p87, %p88
      %p90 = scmp.ne.s32.totalorder %s78, %s79
      %p91 = scmp.eq.s32.totalorder %s27, 1
      %p92 = por %p90, %p91
      %p94 = scmp.ne.s32.totalorder %s79, %s93
      %p95 = scmp.eq.s32.totalorder %s27, 0
      %p96 = por %p94, %p95
      %s97 = ssub.s32 %s21, %s28
      %p98 = scmp.eq.s32.totalorder %s97, 0
      %s100 = sadd.s32 %s99, 1
      %s101 = scalar_select %p98, %s99, %s100
      %p104 = pneg %p98
      %p105 = scmp.eq.s32.totalorder %s21, 1
      %p106 = por %p104, %p105
      %p107 = scmp.ne.s32.totalorder %s99, %s102
      %p108 = scmp.eq.s32.totalorder %s21, 0
      %p109 = por %p107, %p108
      %p110 = scmp.ne.s32.totalorder %s99, %s102
      %p111 = scmp.eq.s32.totalorder %s26, 1
      %p112 = por %p110, %p111
      %p113 = scmp.ne.s32.totalorder %s102, %s103
      %p114 = scmp.eq.s32.totalorder %s26, 0
      %p115 = por %p113, %p114
      %p116 = scmp.ne.s32.totalorder %s102, %s103
      %p117 = scmp.eq.s32.totalorder %s27, 1
      %p118 = por %p116, %p117
      %p120 = scmp.ne.s32.totalorder %s103, %s119
      %p121 = scmp.eq.s32.totalorder %s27, 0
      %p122 = por %p120, %p121
      %s123 = ssub.s32 %s21, %s28
      %p124 = scmp.eq.s32.totalorder %s123, 0
      %s126 = sadd.s32 %s125, 1
      %s127 = scalar_select %p124, %s125, %s126
      %p130 = pneg %p124
      %p131 = scmp.eq.s32.totalorder %s21, 1
      %p132 = por %p130, %p131
      %p133 = scmp.ne.s32.totalorder %s125, %s128
      %p134 = scmp.eq.s32.totalorder %s21, 0
      %p135 = por %p133, %p134
      %p136 = scmp.ne.s32.totalorder %s125, %s128
      %p137 = scmp.eq.s32.totalorder %s26, 1
      %p138 = por %p136, %p137
      %p139 = scmp.ne.s32.totalorder %s128, %s129
      %p140 = scmp.eq.s32.totalorder %s26, 0
      %p141 = por %p139, %p140
      %p142 = scmp.ne.s32.totalorder %s128, %s129
      %p143 = scmp.eq.s32.totalorder %s27, 1
      %p144 = por %p142, %p143
      %p146 = scmp.ne.s32.totalorder %s129, %s145
      %p147 = scmp.eq.s32.totalorder %s27, 0
      %p148 = por %p146, %p147
      %p149 = scmp.le.s32.totalorder 1, %s21
      %p150 = scmp.lt.s32.totalorder %s21, 3
      %p151 = pnand %p149, %p150
      %p152 = pneg %p151
      // Predicated region
      $region9: #{tpu_custom_call.1} parent=5 // pred_check
        _
      $region10: #{tpu_custom_call.1} parent=5 // pred_check_branch
        %154 = sbr.rel (%p151) target = $region12
      $region11: #{tpu_custom_call.1} parent=5 // pred_region
        %s155 = ssub.s32 %s21, 1
        // Predicated region
        $region13: #{tpu_custom_call.1} parent=11 // pred_check
          %p156 = pneg %p68
        $region14: #{tpu_custom_call.1} parent=11 // pred_check_branch
          %158 = sbr.rel (%p156) target = $region16
        $region15: #{tpu_custom_call.1} parent=11 // pred_region
          %160 = vsyncadd [#allocation6], 0
          %s161 = sshll.u32 %s1, 4
          %s162 = int_to_ptr.hbm [resolvable:$true] %s161
          %s163 = sshll.u32 [#allocation5], 4
          %s164 = int_to_ptr.vmem [resolvable:$true] %s163
          %169 = dma.hbm_to_vmem [thread:$0]  %s162, 2048, %s164, [#allocation6], 128, 128, 8
        $region16: #{tpu_custom_call.1} parent=11 // pred_fallthru
          _
        // Predicated region
        $region17: #{tpu_custom_call.1} parent=11 // pred_check
          %p170 = pneg %p89
        $region18: #{tpu_custom_call.1} parent=11 // pred_check_branch
          %172 = sbr.rel (%p170) target = $region20
        $region19: #{tpu_custom_call.1} parent=11 // pred_region
          _
        $region20: #{tpu_custom_call.1} parent=11 // pred_fallthru
          _
      $region12: #{tpu_custom_call.1} parent=5 // pred_fallthru
        _
      %p173 = scmp.lt.s32.totalorder %s21, 2
      // Predicated region
      $region21: #{tpu_custom_call.1} parent=5 // pred_check
        %p174 = pneg %p173
      $region22: #{tpu_custom_call.1} parent=5 // pred_check_branch
        %176 = sbr.rel (%p174) target = $region24
      $region23: #{tpu_custom_call.1} parent=5 // pred_region
        // Predicated region
        $region25: #{tpu_custom_call.1} parent=23 // pred_check
          %p177 = pneg %p41
        $region26: #{tpu_custom_call.1} parent=23 // pred_check_branch
          %179 = sbr.rel (%p177) target = $region28
        $region27: #{tpu_custom_call.1} parent=23 // pred_region
          %s180 = sand.u32 %s31, 1
          %s181 = scalar_lea.sflag [#allocation3], %s180
          %s182 = sand.u32 %s31, 1
          %s183 = smul.addr %s182, 128
          %s184 = scalar_lea.vmem [#allocation2], %s183
          %s185 = smul.u32 32, %s21
          %187 = vsyncadd %s181, 0
          %s188 = smul.addr %s185, 4
          %s189 = scalar_lea.hbm %s0, %s188
          %s190 = sshll.u32 %s189, 4
          %s191 = int_to_ptr.hbm [resolvable:$true] %s190
          %s192 = sshll.u32 %s184, 4
          %s193 = int_to_ptr.vmem [resolvable:$true] %s192
          %198 = dma.hbm_to_vmem [thread:$0]  %s191, 2048, %s193, %s181, 64, 64, 4
        $region28: #{tpu_custom_call.1} parent=23 // pred_fallthru
          _
      $region24: #{tpu_custom_call.1} parent=5 // pred_fallthru
        _
      %p199 = scmp.le.s32.totalorder 1, %s21
      %p200 = scmp.lt.s32.totalorder %s21, 3
      %p201 = pnand %p199, %p200
      %p202 = pneg %p201
      // Predicated region
      $region29: #{tpu_custom_call.1} parent=5 // pred_check
        _
      $region30: #{tpu_custom_call.1} parent=5 // pred_check_branch
        %204 = sbr.rel (%p201) target = $region32
      $region31: #{tpu_custom_call.1} parent=5 // pred_region
        %s205 = ssub.s32 %s21, 1
        %s206 = sand.u32 %s34, 1
        %s207 = scalar_lea.sflag [#allocation3], %s206
        %s208 = sand.u32 %s34, 1
        %s209 = smul.addr %s208, 128
        %s210 = scalar_lea.vmem [#allocation2], %s209
        // Predicated region
        $region33: #{tpu_custom_call.1} parent=31 // pred_check
          %p211 = pneg %p47
        $region34: #{tpu_custom_call.1} parent=31 // pred_check_branch
          %213 = sbr.rel (%p211) target = $region36
        $region35: #{tpu_custom_call.1} parent=31 // pred_region
          %215 = dma.done %s207, 2048
        $region36: #{tpu_custom_call.1} parent=31 // pred_fallthru
          _
        // Predicated region
        $region37: #{tpu_custom_call.1} parent=31 // pred_check
          %p216 = pneg %p68
        $region38: #{tpu_custom_call.1} parent=31 // pred_check_branch
          %218 = sbr.rel (%p216) target = $region40
        $region39: #{tpu_custom_call.1} parent=31 // pred_region
          %220 = dma.done [#allocation6], 2048
        $region40: #{tpu_custom_call.1} parent=31 // pred_fallthru
          _
        %s221 = sand.u32 %s34, 1
        %s222 = scalar_lea.sflag [#allocation3], %s221
        %s223 = sand.u32 %s34, 1
        %s224 = smul.addr %s223, 128
        %s225 = scalar_lea.vmem [#allocation2], %s224
        %p226 = pneg %p47
        %p227 = pneg %p44
        %p228 = pneg %p68
        %p229 = pneg %p65
        %p230 = pneg %p89
        %p231 = pneg %p86
        %p232 = pneg %p115
        %p233 = pneg %p112
        %s234 = sand.u32 %s102, 1
        %s235 = scalar_lea.sflag [#allocation4], %s234
        %s236 = sand.u32 %s102, 1
        %s237 = smul.addr %s236, 128
        %s238 = scalar_lea.vmem [#allocation7], %s237
        %p239 = pneg %p141
        %p240 = pneg %p138
        %s241 = sand.u32 %s128, 1
        %s242 = scalar_lea.sflag [#allocation9], %s241
        %s243 = sand.u32 %s128, 1
        %s244 = smul.addr %s243, 256
        %s245 = scalar_lea.vmem [#allocation8], %s244
        %s246 = smul.u32 32, %s26
        %s247 = smul.u32 32, %s26
        %s248 = smul.u32 32, %s26
        %v249 = vld [vmem:[%s210] sm:$0xf]
        %v250 = vld [vmem:[%s210 + $0x4] sm:$0xf]
        %v251 = vld [vmem:[%s210 + $0x8] sm:$0xf]
        %v252 = vld [vmem:[%s210 + $0xc] sm:$0xf]
        %v253 = vld [vmem:[%s210 + $0x10] sm:$0xf]
        %v254 = vld [vmem:[%s210 + $0x14] sm:$0xf]
        %v255 = vld [vmem:[%s210 + $0x18] sm:$0xf]
        %v256 = vld [vmem:[%s210 + $0x1c] sm:$0xf]
        %v257 = vld [vmem:[%s210 + $0x20] sm:$0xf]
        %v258 = vld [vmem:[%s210 + $0x24] sm:$0xf]
        %v259 = vld [vmem:[%s210 + $0x28] sm:$0xf]
        %v260 = vld [vmem:[%s210 + $0x2c] sm:$0xf]
        %v261 = vld [vmem:[%s210 + $0x30] sm:$0xf]
        %v262 = vld [vmem:[%s210 + $0x34] sm:$0xf]
        %v263 = vld [vmem:[%s210 + $0x38] sm:$0xf]
        %v264 = vld [vmem:[%s210 + $0x3c] sm:$0xf]
        %v265 = vld [vmem:[%s210 + $0x40] sm:$0xf]
        %v266 = vld [vmem:[%s210 + $0x44] sm:$0xf]
        %v267 = vld [vmem:[%s210 + $0x48] sm:$0xf]
        %v268 = vld [vmem:[%s210 + $0x4c] sm:$0xf]
        %v269 = vld [vmem:[%s210 + $0x50] sm:$0xf]
        %v270 = vld [vmem:[%s210 + $0x54] sm:$0xf]
        %v271 = vld [vmem:[%s210 + $0x58] sm:$0xf]
        %v272 = vld [vmem:[%s210 + $0x5c] sm:$0xf]
        %v273 = vld [vmem:[%s210 + $0x60] sm:$0xf]
        %v274 = vld [vmem:[%s210 + $0x64] sm:$0xf]
        %v275 = vld [vmem:[%s210 + $0x68] sm:$0xf]
        %v276 = vld [vmem:[%s210 + $0x6c] sm:$0xf]
        %v277 = vld [vmem:[%s210 + $0x70] sm:$0xf]
        %v278 = vld [vmem:[%s210 + $0x74] sm:$0xf]
        %v279 = vld [vmem:[%s210 + $0x78] sm:$0xf]
        %v280 = vld [vmem:[%s210 + $0x7c] sm:$0xf]
        %v281 = vld [vmem:[#allocation5] sm:$0xff]
        %v282 = vld [vmem:[#allocation5 + $0x8] sm:$0xff]
        %v283 = vld [vmem:[#allocation5 + $0x10] sm:$0xff]
        %v284 = vld [vmem:[#allocation5 + $0x18] sm:$0xff]
        %v285 = vld [vmem:[#allocation5 + $0x20] sm:$0xff]
        %v286 = vld [vmem:[#allocation5 + $0x28] sm:$0xff]
        %v287 = vld [vmem:[#allocation5 + $0x30] sm:$0xff]
        %v288 = vld [vmem:[#allocation5 + $0x38] sm:$0xff]
        %v289 = vld [vmem:[#allocation5 + $0x40] sm:$0xff]
        %v290 = vld [vmem:[#allocation5 + $0x48] sm:$0xff]
        %v291 = vld [vmem:[#allocation5 + $0x50] sm:$0xff]
        %v292 = vld [vmem:[#allocation5 + $0x58] sm:$0xff]
        %v293 = vld [vmem:[#allocation5 + $0x60] sm:$0xff]
        %v294 = vld [vmem:[#allocation5 + $0x68] sm:$0xff]
        %v295 = vld [vmem:[#allocation5 + $0x70] sm:$0xff]
        %v296 = vld [vmem:[#allocation5 + $0x78] sm:$0xff]
        %v329 = vunpack.c.l.b16 %v249
        %v330 = vunpack.c.l.b16 %v250
        %v331 = vunpack.c.l.b16 %v251
        %v332 = vunpack.c.l.b16 %v252
        %v333 = vunpack.c.l.b16 %v253
        %v334 = vunpack.c.l.b16 %v254
        %v335 = vunpack.c.l.b16 %v255
        %v336 = vunpack.c.l.b16 %v256
        %v337 = vunpack.c.l.b16 %v257
        %v338 = vunpack.c.l.b16 %v258
        %v339 = vunpack.c.l.b16 %v259
        %v340 = vunpack.c.l.b16 %v260
        %v341 = vunpack.c.l.b16 %v261
        %v342 = vunpack.c.l.b16 %v262
        %v343 = vunpack.c.l.b16 %v263
        %v344 = vunpack.c.l.b16 %v264
        %v345 = vunpack.c.l.b16 %v265
        %v346 = vunpack.c.l.b16 %v266
        %v347 = vunpack.c.l.b16 %v267
        %v348 = vunpack.c.l.b16 %v268
        %v349 = vunpack.c.l.b16 %v269
        %v350 = vunpack.c.l.b16 %v270
        %v351 = vunpack.c.l.b16 %v271
        %v352 = vunpack.c.l.b16 %v272
        %v353 = vunpack.c.l.b16 %v273
        %v354 = vunpack.c.l.b16 %v274
        %v355 = vunpack.c.l.b16 %v275
        %v356 = vunpack.c.l.b16 %v276
        %v357 = vunpack.c.l.b16 %v277
        %v358 = vunpack.c.l.b16 %v278
        %v359 = vunpack.c.l.b16 %v279
        %v360 = vunpack.c.l.b16 %v280
        %v361 = vpack.c.b16 %v330, %v329
        %v362 = vpack.c.b16 %v332, %v331
        %v363 = vpack.c.b16 %v334, %v333
        %v364 = vpack.c.b16 %v336, %v335
        %v365 = vpack.c.b16 %v338, %v337
        %v366 = vpack.c.b16 %v340, %v339
        %v367 = vpack.c.b16 %v342, %v341
        %v368 = vpack.c.b16 %v344, %v343
        %v369 = vpack.c.b16 %v346, %v345
        %v370 = vpack.c.b16 %v348, %v347
        %v371 = vpack.c.b16 %v350, %v349
        %v372 = vpack.c.b16 %v352, %v351
        %v373 = vpack.c.b16 %v354, %v353
        %v374 = vpack.c.b16 %v356, %v355
        %v375 = vpack.c.b16 %v358, %v357
        %v376 = vpack.c.b16 %v360, %v359
        %v409 = vunpack.c.l.b16 %v281
        %v410 = vunpack.c.h.b16 %v281
        %v411 = vunpack.c.l.b16 %v282
        %v412 = vunpack.c.h.b16 %v282
        %v413 = vunpack.c.l.b16 %v283
        %v414 = vunpack.c.h.b16 %v283
        %v415 = vunpack.c.l.b16 %v284
        %v416 = vunpack.c.h.b16 %v284
        %v417 = vunpack.c.l.b16 %v285
        %v418 = vunpack.c.h.b16 %v285
        %v419 = vunpack.c.l.b16 %v286
        %v420 = vunpack.c.h.b16 %v286
        %v421 = vunpack.c.l.b16 %v287
        %v422 = vunpack.c.h.b16 %v287
        %v423 = vunpack.c.l.b16 %v288
        %v424 = vunpack.c.h.b16 %v288
        %v425 = vunpack.c.l.b16 %v289
        %v426 = vunpack.c.h.b16 %v289
        %v427 = vunpack.c.l.b16 %v290
        %v428 = vunpack.c.h.b16 %v290
        %v429 = vunpack.c.l.b16 %v291
        %v430 = vunpack.c.h.b16 %v291
        %v431 = vunpack.c.l.b16 %v292
        %v432 = vunpack.c.h.b16 %v292
        %v433 = vunpack.c.l.b16 %v293
        %v434 = vunpack.c.h.b16 %v293
        %v435 = vunpack.c.l.b16 %v294
        %v436 = vunpack.c.h.b16 %v294
        %v437 = vunpack.c.l.b16 %v295
        %v438 = vunpack.c.h.b16 %v295
        %v439 = vunpack.c.l.b16 %v296
        %v440 = vunpack.c.h.b16 %v296
        %v441 = vpack.c.b16 %v411, %v409
        %v442 = vpack.c.b16 %v412, %v410
        %v443 = vpack.c.b16 %v415, %v413
        %v444 = vpack.c.b16 %v416, %v414
        %v445 = vpack.c.b16 %v419, %v417
        %v446 = vpack.c.b16 %v420, %v418
        %v447 = vpack.c.b16 %v423, %v421
        %v448 = vpack.c.b16 %v424, %v422
        %v449 = vpack.c.b16 %v427, %v425
        %v450 = vpack.c.b16 %v428, %v426
        %v451 = vpack.c.b16 %v431, %v429
        %v452 = vpack.c.b16 %v432, %v430
        %v453 = vpack.c.b16 %v435, %v433
        %v454 = vpack.c.b16 %v436, %v434
        %v455 = vpack.c.b16 %v439, %v437
        %v456 = vpack.c.b16 %v440, %v438
        %473 = vmatpush.bf16.msra.mxu0 %v455
        %474 = vmatpush.bf16.msra.mxu0 %v453
        %475 = vmatpush.bf16.msra.mxu0 %v451
        %476 = vmatpush.bf16.msra.mxu0 %v449
        %477 = vmatpush.bf16.msra.mxu0 %v447
        %478 = vmatpush.bf16.msra.mxu0 %v445
        %479 = vmatpush.bf16.msra.mxu0 %v443
        %480 = vmatpush.bf16.msra.mxu0 %v441
        %481 = vmatmul.bf16.gmra.mxu0 %v361
        %v482 = vpop.f32.mrf.mxu0
        %v483 = vadd.f32 0.0, %v482
        %v484 = vpop.f32.mrf.mxu0
        %v485 = vadd.f32 0.0, %v484
        %486 = vmatmul.bf16.gmra.mxu0 %v362
        %v487 = vpop.f32.mrf.mxu0
        %v488 = vadd.f32 0.0, %v487
        %v489 = vpop.f32.mrf.mxu0
        %v490 = vadd.f32 0.0, %v489
        %491 = vmatmul.bf16.gmra.mxu0 %v363
        %v492 = vpop.f32.mrf.mxu0
        %v493 = vadd.f32 0.0, %v492
        %v494 = vpop.f32.mrf.mxu0
        %v495 = vadd.f32 0.0, %v494
        %496 = vmatmul.bf16.gmra.mxu0 %v364
        %v497 = vpop.f32.mrf.mxu0
        %v498 = vadd.f32 0.0, %v497
        %v499 = vpop.f32.mrf.mxu0
        %v500 = vadd.f32 0.0, %v499
        %501 = vmatmul.bf16.gmra.mxu0 %v365
        %v502 = vpop.f32.mrf.mxu0
        %v503 = vadd.f32 0.0, %v502
        %v504 = vpop.f32.mrf.mxu0
        %v505 = vadd.f32 0.0, %v504
        %506 = vmatmul.bf16.gmra.mxu0 %v366
        %v507 = vpop.f32.mrf.mxu0
        %v508 = vadd.f32 0.0, %v507
        %v509 = vpop.f32.mrf.mxu0
        %v510 = vadd.f32 0.0, %v509
        %511 = vmatmul.bf16.gmra.mxu0 %v367
        %v512 = vpop.f32.mrf.mxu0
        %v513 = vadd.f32 0.0, %v512
        %v514 = vpop.f32.mrf.mxu0
        %v515 = vadd.f32 0.0, %v514
        %516 = vmatmul.bf16.gmra.mxu0 %v368
        %v517 = vpop.f32.mrf.mxu0
        %v518 = vadd.f32 0.0, %v517
        %v519 = vpop.f32.mrf.mxu0
        %v520 = vadd.f32 0.0, %v519
        %521 = vmatmul.bf16.gmra.mxu0 %v369
        %v522 = vpop.f32.mrf.mxu0
        %v523 = vadd.f32 0.0, %v522
        %v524 = vpop.f32.mrf.mxu0
        %v525 = vadd.f32 0.0, %v524
        %526 = vmatmul.bf16.gmra.mxu0 %v370
        %v527 = vpop.f32.mrf.mxu0
        %v528 = vadd.f32 0.0, %v527
        %v529 = vpop.f32.mrf.mxu0
        %v530 = vadd.f32 0.0, %v529
        %531 = vmatmul.bf16.gmra.mxu0 %v371
        %v532 = vpop.f32.mrf.mxu0
        %v533 = vadd.f32 0.0, %v532
        %v534 = vpop.f32.mrf.mxu0
        %v535 = vadd.f32 0.0, %v534
        %536 = vmatmul.bf16.gmra.mxu0 %v372
        %v537 = vpop.f32.mrf.mxu0
        %v538 = vadd.f32 0.0, %v537
        %v539 = vpop.f32.mrf.mxu0
        %v540 = vadd.f32 0.0, %v539
        %541 = vmatmul.bf16.gmra.mxu0 %v373
        %v542 = vpop.f32.mrf.mxu0
        %v543 = vadd.f32 0.0, %v542
        %v544 = vpop.f32.mrf.mxu0
        %v545 = vadd.f32 0.0, %v544
        %546 = vmatmul.bf16.gmra.mxu0 %v374
        %v547 = vpop.f32.mrf.mxu0
        %v548 = vadd.f32 0.0, %v547
        %v549 = vpop.f32.mrf.mxu0
        %v550 = vadd.f32 0.0, %v549
        %551 = vmatmul.bf16.gmra.mxu0 %v375
        %v552 = vpop.f32.mrf.mxu0
        %v553 = vadd.f32 0.0, %v552
        %v554 = vpop.f32.mrf.mxu0
        %v555 = vadd.f32 0.0, %v554
        %556 = vmatmul.bf16.gmra.mxu0 %v376
        %v557 = vpop.f32.mrf.mxu0
        %v558 = vadd.f32 0.0, %v557
        %v559 = vpop.f32.mrf.mxu0
        %v560 = vadd.f32 0.0, %v559
        %561 = vdwg.mxu0
        %562 = vmatpush.bf16.msra.mxu0 %v456
        %563 = vmatpush.bf16.msra.mxu0 %v454
        %564 = vmatpush.bf16.msra.mxu0 %v452
        %565 = vmatpush.bf16.msra.mxu0 %v450
        %566 = vmatpush.bf16.msra.mxu0 %v448
        %567 = vmatpush.bf16.msra.mxu0 %v446
        %568 = vmatpush.bf16.msra.mxu0 %v444
        %569 = vmatpush.bf16.msra.mxu0 %v442
        %570 = vmatmul.bf16.gmra.mxu0 %v361
        %v571 = vpop.f32.mrf.mxu0
        %v572 = vadd.f32 0.0, %v571
        %v573 = vpop.f32.mrf.mxu0
        %v574 = vadd.f32 0.0, %v573
        %575 = vmatmul.bf16.gmra.mxu0 %v362
        %v576 = vpop.f32.mrf.mxu0
        %v577 = vadd.f32 0.0, %v576
        %v578 = vpop.f32.mrf.mxu0
        %v579 = vadd.f32 0.0, %v578
        %580 = vmatmul.bf16.gmra.mxu0 %v363
        %v581 = vpop.f32.mrf.mxu0
        %v582 = vadd.f32 0.0, %v581
        %v583 = vpop.f32.mrf.mxu0
        %v584 = vadd.f32 0.0, %v583
        %585 = vmatmul.bf16.gmra.mxu0 %v364
        %v586 = vpop.f32.mrf.mxu0
        %v587 = vadd.f32 0.0, %v586
        %v588 = vpop.f32.mrf.mxu0
        %v589 = vadd.f32 0.0, %v588
        %590 = vmatmul.bf16.gmra.mxu0 %v365
        %v591 = vpop.f32.mrf.mxu0
        %v592 = vadd.f32 0.0, %v591
        %v593 = vpop.f32.mrf.mxu0
        %v594 = vadd.f32 0.0, %v593
        %595 = vmatmul.bf16.gmra.mxu0 %v366
        %v596 = vpop.f32.mrf.mxu0
        %v597 = vadd.f32 0.0, %v596
        %v598 = vpop.f32.mrf.mxu0
        %v599 = vadd.f32 0.0, %v598
        %600 = vmatmul.bf16.gmra.mxu0 %v367
        %v601 = vpop.f32.mrf.mxu0
        %v602 = vadd.f32 0.0, %v601
        %v603 = vpop.f32.mrf.mxu0
        %v604 = vadd.f32 0.0, %v603
        %605 = vmatmul.bf16.gmra.mxu0 %v368
        %v606 = vpop.f32.mrf.mxu0
        %v607 = vadd.f32 0.0, %v606
        %v608 = vpop.f32.mrf.mxu0
        %v609 = vadd.f32 0.0, %v608
        %610 = vmatmul.bf16.gmra.mxu0 %v369
        %v611 = vpop.f32.mrf.mxu0
        %v612 = vadd.f32 0.0, %v611
        %v613 = vpop.f32.mrf.mxu0
        %v614 = vadd.f32 0.0, %v613
        %615 = vmatmul.bf16.gmra.mxu0 %v370
        %v616 = vpop.f32.mrf.mxu0
        %v617 = vadd.f32 0.0, %v616
        %v618 = vpop.f32.mrf.mxu0
        %v619 = vadd.f32 0.0, %v618
        %620 = vmatmul.bf16.gmra.mxu0 %v371
        %v621 = vpop.f32.mrf.mxu0
        %v622 = vadd.f32 0.0, %v621
        %v623 = vpop.f32.mrf.mxu0
        %v624 = vadd.f32 0.0, %v623
        %625 = vmatmul.bf16.gmra.mxu0 %v372
        %v626 = vpop.f32.mrf.mxu0
        %v627 = vadd.f32 0.0, %v626
        %v628 = vpop.f32.mrf.mxu0
        %v629 = vadd.f32 0.0, %v628
        %630 = vmatmul.bf16.gmra.mxu0 %v373
        %v631 = vpop.f32.mrf.mxu0
        %v632 = vadd.f32 0.0, %v631
        %v633 = vpop.f32.mrf.mxu0
        %v634 = vadd.f32 0.0, %v633
        %635 = vmatmul.bf16.gmra.mxu0 %v374
        %v636 = vpop.f32.mrf.mxu0
        %v637 = vadd.f32 0.0, %v636
        %v638 = vpop.f32.mrf.mxu0
        %v639 = vadd.f32 0.0, %v638
        %640 = vmatmul.bf16.gmra.mxu0 %v375
        %v641 = vpop.f32.mrf.mxu0
        %v642 = vadd.f32 0.0, %v641
        %v643 = vpop.f32.mrf.mxu0
        %v644 = vadd.f32 0.0, %v643
        %645 = vmatmul.bf16.gmra.mxu0 %v376
        %v646 = vpop.f32.mrf.mxu0
        %v647 = vadd.f32 0.0, %v646
        %v648 = vpop.f32.mrf.mxu0
        %v649 = vadd.f32 0.0, %v648
        %650 = vdwg.mxu0
        %v651 = vpack.c.bf16 %v483, %v483
        %v652 = vpack.c.bf16 %v485, %v485
        %v653 = vpack.c.bf16 %v488, %v488
        %v654 = vpack.c.bf16 %v490, %v490
        %v655 = vpack.c.bf16 %v493, %v493
        %v656 = vpack.c.bf16 %v495, %v495
        %v657 = vpack.c.bf16 %v498, %v498
        %v658 = vpack.c.bf16 %v500, %v500
        %v659 = vpack.c.bf16 %v503, %v503
        %v660 = vpack.c.bf16 %v505, %v505
        %v661 = vpack.c.bf16 %v508, %v508
        %v662 = vpack.c.bf16 %v510, %v510
        %v663 = vpack.c.bf16 %v513, %v513
        %v664 = vpack.c.bf16 %v515, %v515
        %v665 = vpack.c.bf16 %v518, %v518
        %v666 = vpack.c.bf16 %v520, %v520
        %v667 = vpack.c.bf16 %v523, %v523
        %v668 = vpack.c.bf16 %v525, %v525
        %v669 = vpack.c.bf16 %v528, %v528
        %v670 = vpack.c.bf16 %v530, %v530
        %v671 = vpack.c.bf16 %v533, %v533
        %v672 = vpack.c.bf16 %v535, %v535
        %v673 = vpack.c.bf16 %v538, %v538
        %v674 = vpack.c.bf16 %v540, %v540
        %v675 = vpack.c.bf16 %v543, %v543
        %v676 = vpack.c.bf16 %v545, %v545
        %v677 = vpack.c.bf16 %v548, %v548
        %v678 = vpack.c.bf16 %v550, %v550
        %v679 = vpack.c.bf16 %v553, %v553
        %v680 = vpack.c.bf16 %v555, %v555
        %v681 = vpack.c.bf16 %v558, %v558
        %v682 = vpack.c.bf16 %v560, %v560
        %683 = vst [vmem:[%s238] sm:$0xf] %v651
        %684 = vst [vmem:[%s238 + $0x4] sm:$0xf] %v652
        %685 = vst [vmem:[%s238 + $0x8] sm:$0xf] %v653
        %686 = vst [vmem:[%s238 + $0xc] sm:$0xf] %v654
        %687 = vst [vmem:[%s238 + $0x10] sm:$0xf] %v655
        %688 = vst [vmem:[%s238 + $0x14] sm:$0xf] %v656
        %689 = vst [vmem:[%s238 + $0x18] sm:$0xf] %v657
        %690 = vst [vmem:[%s238 + $0x1c] sm:$0xf] %v658
        %691 = vst [vmem:[%s238 + $0x20] sm:$0xf] %v659
        %692 = vst [vmem:[%s238 + $0x24] sm:$0xf] %v660
        %693 = vst [vmem:[%s238 + $0x28] sm:$0xf] %v661
        %694 = vst [vmem:[%s238 + $0x2c] sm:$0xf] %v662
        %695 = vst [vmem:[%s238 + $0x30] sm:$0xf] %v663
        %696 = vst [vmem:[%s238 + $0x34] sm:$0xf] %v664
        %697 = vst [vmem:[%s238 + $0x38] sm:$0xf] %v665
        %698 = vst [vmem:[%s238 + $0x3c] sm:$0xf] %v666
        %699 = vst [vmem:[%s238 + $0x40] sm:$0xf] %v667
        %700 = vst [vmem:[%s238 + $0x44] sm:$0xf] %v668
        %701 = vst [vmem:[%s238 + $0x48] sm:$0xf] %v669
        %702 = vst [vmem:[%s238 + $0x4c] sm:$0xf] %v670
        %703 = vst [vmem:[%s238 + $0x50] sm:$0xf] %v671
        %704 = vst [vmem:[%s238 + $0x54] sm:$0xf] %v672
        %705 = vst [vmem:[%s238 + $0x58] sm:$0xf] %v673
        %706 = vst [vmem:[%s238 + $0x5c] sm:$0xf] %v674
        %707 = vst [vmem:[%s238 + $0x60] sm:$0xf] %v675
        %708 = vst [vmem:[%s238 + $0x64] sm:$0xf] %v676
        %709 = vst [vmem:[%s238 + $0x68] sm:$0xf] %v677
        %710 = vst [vmem:[%s238 + $0x6c] sm:$0xf] %v678
        %711 = vst [vmem:[%s238 + $0x70] sm:$0xf] %v679
        %712 = vst [vmem:[%s238 + $0x74] sm:$0xf] %v680
        %713 = vst [vmem:[%s238 + $0x78] sm:$0xf] %v681
        %714 = vst [vmem:[%s238 + $0x7c] sm:$0xf] %v682
        %v715 = vld [vmem:[%s2] sm:$0x1]
        %v717 = vperm.slane %v715, 0
        %v719 = vadd.f32 %v572, %v717
        %v720 = vadd.f32 %v574, %v717
        %v721 = vadd.f32 %v577, %v717
        %v722 = vadd.f32 %v579, %v717
        %v723 = vadd.f32 %v582, %v717
        %v724 = vadd.f32 %v584, %v717
        %v725 = vadd.f32 %v587, %v717
        %v726 = vadd.f32 %v589, %v717
        %v727 = vadd.f32 %v592, %v717
        %v728 = vadd.f32 %v594, %v717
        %v729 = vadd.f32 %v597, %v717
        %v730 = vadd.f32 %v599, %v717
        %v731 = vadd.f32 %v602, %v717
        %v732 = vadd.f32 %v604, %v717
        %v733 = vadd.f32 %v607, %v717
        %v734 = vadd.f32 %v609, %v717
        %v735 = vadd.f32 %v612, %v717
        %v736 = vadd.f32 %v614, %v717
        %v737 = vadd.f32 %v617, %v717
        %v738 = vadd.f32 %v619, %v717
        %v739 = vadd.f32 %v622, %v717
        %v740 = vadd.f32 %v624, %v717
        %v741 = vadd.f32 %v627, %v717
        %v742 = vadd.f32 %v629, %v717
        %v743 = vadd.f32 %v632, %v717
        %v744 = vadd.f32 %v634, %v717
        %v745 = vadd.f32 %v637, %v717
        %v746 = vadd.f32 %v639, %v717
        %v747 = vadd.f32 %v642, %v717
        %v748 = vadd.f32 %v644, %v717
        %v749 = vadd.f32 %v647, %v717
        %v750 = vadd.f32 %v649, %v717
        %751 = vst [vmem:[%s245] sm:$0xff] %v719
        %752 = vst [vmem:[%s245 + $0x8] sm:$0xff] %v720
        %753 = vst [vmem:[%s245 + $0x10] sm:$0xff] %v721
        %754 = vst [vmem:[%s245 + $0x18] sm:$0xff] %v722
        %755 = vst [vmem:[%s245 + $0x20] sm:$0xff] %v723
        %756 = vst [vmem:[%s245 + $0x28] sm:$0xff] %v724
        %757 = vst [vmem:[%s245 + $0x30] sm:$0xff] %v725
        %758 = vst [vmem:[%s245 + $0x38] sm:$0xff] %v726
        %759 = vst [vmem:[%s245 + $0x40] sm:$0xff] %v727
        %760 = vst [vmem:[%s245 + $0x48] sm:$0xff] %v728
        %761 = vst [vmem:[%s245 + $0x50] sm:$0xff] %v729
        %762 = vst [vmem:[%s245 + $0x58] sm:$0xff] %v730
        %763 = vst [vmem:[%s245 + $0x60] sm:$0xff] %v731
        %764 = vst [vmem:[%s245 + $0x68] sm:$0xff] %v732
        %765 = vst [vmem:[%s245 + $0x70] sm:$0xff] %v733
        %766 = vst [vmem:[%s245 + $0x78] sm:$0xff] %v734
        %767 = vst [vmem:[%s245 + $0x80] sm:$0xff] %v735
        %768 = vst [vmem:[%s245 + $0x88] sm:$0xff] %v736
        %769 = vst [vmem:[%s245 + $0x90] sm:$0xff] %v737
        %770 = vst [vmem:[%s245 + $0x98] sm:$0xff] %v738
        %771 = vst [vmem:[%s245 + $0xa0] sm:$0xff] %v739
        %772 = vst [vmem:[%s245 + $0xa8] sm:$0xff] %v740
        %773 = vst [vmem:[%s245 + $0xb0] sm:$0xff] %v741
        %774 = vst [vmem:[%s245 + $0xb8] sm:$0xff] %v742
        %775 = vst [vmem:[%s245 + $0xc0] sm:$0xff] %v743
        %776 = vst [vmem:[%s245 + $0xc8] sm:$0xff] %v744
        %777 = vst [vmem:[%s245 + $0xd0] sm:$0xff] %v745
        %778 = vst [vmem:[%s245 + $0xd8] sm:$0xff] %v746
        %779 = vst [vmem:[%s245 + $0xe0] sm:$0xff] %v747
        %780 = vst [vmem:[%s245 + $0xe8] sm:$0xff] %v748
        %781 = vst [vmem:[%s245 + $0xf0] sm:$0xff] %v749
        %782 = vst [vmem:[%s245 + $0xf8] sm:$0xff] %v750
        %s783 = sand.u32 %s102, 1
        %s784 = scalar_lea.sflag [#allocation4], %s783
        %s785 = sand.u32 %s102, 1
        %s786 = smul.addr %s785, 128
        %s787 = scalar_lea.vmem [#allocation7], %s786
        %s788 = sand.u32 %s128, 1
        %s789 = scalar_lea.sflag [#allocation9], %s788
        %s790 = sand.u32 %s128, 1
        %s791 = smul.addr %s790, 256
        %s792 = scalar_lea.vmem [#allocation8], %s791
        // Predicated region
        $region41: #{tpu_custom_call.1} parent=31 // pred_check
          %p793 = pneg %p112
        $region42: #{tpu_custom_call.1} parent=31 // pred_check_branch
          %795 = sbr.rel (%p793) target = $region44
        $region43: #{tpu_custom_call.1} parent=31 // pred_region
          %s796 = smul.u32 32, %s26
          %798 = vsyncadd %s784, 0
          %s799 = smul.addr %s796, 4
          %s800 = scalar_lea.hbm %s3, %s799
          %s801 = sshll.u32 %s787, 4
          %s802 = int_to_ptr.vmem [resolvable:$true] %s801
          %s803 = sshll.u32 %s800, 4
          %s804 = int_to_ptr.hbm [resolvable:$true] %s803
          %809 = dma.vmem_to_hbm [thread:$0]  %s802, 2048, %s804, %s784, 64, 64, 4
        $region44: #{tpu_custom_call.1} parent=31 // pred_fallthru
          _
        // Predicated region
        $region45: #{tpu_custom_call.1} parent=31 // pred_check
          %p810 = pneg %p138
        $region46: #{tpu_custom_call.1} parent=31 // pred_check_branch
          %812 = sbr.rel (%p810) target = $region48
        $region47: #{tpu_custom_call.1} parent=31 // pred_region
          %s813 = smul.u32 32, %s26
          %815 = vsyncadd %s789, 0
          %s816 = smul.addr %s813, 8
          %s817 = scalar_lea.hbm %s4, %s816
          %s818 = sshll.u32 %s792, 4
          %s819 = int_to_ptr.vmem [resolvable:$true] %s818
          %s820 = sshll.u32 %s817, 4
          %s821 = int_to_ptr.hbm [resolvable:$true] %s820
          %826 = dma.vmem_to_hbm [thread:$0]  %s819, 4096, %s821, %s789, 128, 128, 8
        $region48: #{tpu_custom_call.1} parent=31 // pred_fallthru
          _
      $region32: #{tpu_custom_call.1} parent=5 // pred_fallthru
        _
      %p827 = scmp.le.s32.totalorder 2, %s21
      // Predicated region
      $region49: #{tpu_custom_call.1} parent=5 // pred_check
        %p828 = pneg %p827
      $region50: #{tpu_custom_call.1} parent=5 // pred_check_branch
        %830 = sbr.rel (%p828) target = $region52
      $region51: #{tpu_custom_call.1} parent=5 // pred_region
        %s831 = ssub.s32 %s21, 2
        // Predicated region
        $region53: #{tpu_custom_call.1} parent=51 // pred_check
          %p832 = pneg %p118
        $region54: #{tpu_custom_call.1} parent=51 // pred_check_branch
          %834 = sbr.rel (%p832) target = $region56
        $region55: #{tpu_custom_call.1} parent=51 // pred_region
          %s835 = sand.u32 %s103, 1
          %s836 = scalar_lea.sflag [#allocation4], %s835
          %s837 = sand.u32 %s103, 1
          %s838 = smul.addr %s837, 128
          %s839 = scalar_lea.vmem [#allocation7], %s838
          %841 = dma.done %s836, 2048
        $region56: #{tpu_custom_call.1} parent=51 // pred_fallthru
          _
        // Predicated region
        $region57: #{tpu_custom_call.1} parent=51 // pred_check
          %p842 = pneg %p144
        $region58: #{tpu_custom_call.1} parent=51 // pred_check_branch
          %844 = sbr.rel (%p842) target = $region60
        $region59: #{tpu_custom_call.1} parent=51 // pred_region
          %s845 = sand.u32 %s129, 1
          %s846 = scalar_lea.sflag [#allocation9], %s845
          %s847 = sand.u32 %s129, 1
          %s848 = smul.addr %s847, 256
          %s849 = scalar_lea.vmem [#allocation8], %s848
          %851 = dma.done %s846, 4096
        $region60: #{tpu_custom_call.1} parent=51 // pred_fallthru
          _
      $region52: #{tpu_custom_call.1} parent=5 // pred_fallthru
        _
    $region6: #{tpu_custom_call.1} parent=1 // loop_footer
      %s25 = sadd.s32 1, %s21
    $region7: #{tpu_custom_call.1} parent=1 // loop_footer_branch
      %20 = sbr.rel target = $region3
    $region8: #{tpu_custom_call.1} parent=1 // loop_exit
      _
    %852 = vsyncpa [#allocation3], 1
    %s853 = scalar_lea.sflag [#allocation3], 1
    %854 = vsyncpa %s853, 1
    %855 = vsyncpa [#allocation6], 1
    %856 = vsyncpa [#allocation4], 1
    %s857 = scalar_lea.sflag [#allocation4], 1
    %858 = vsyncpa %s857, 1
    %859 = vsyncpa [#allocation9], 1
    %s860 = scalar_lea.sflag [#allocation9], 1
    %861 = vsyncpa %s860, 1

</llo_original>
